<compile_context>
chip_gen: v5e
topology: v5e:2x2
jax: 0.10.0
libtpu: 0.0.40
codegen_flags: <defaults>
</compile_context>

<pallas_src>
import numpy as np
import jax
import jax.numpy as jnp
from jax.experimental import pallas as pl
from jax.experimental.pallas import tpu as pltpu

SIZES = (1, 2, 3, 6)                       # pyramid pooling sizes, as in PyTorch

_SQ = pl.Squeezed() if hasattr(pl, "Squeezed") else None   # squeezed batch dim


def _round_up(x, m):
    return ((x + m - 1) // m) * m


def _vmem_limit_bytes():
    """Generation-aware scoped-VMEM budget (~75% of physical per-TC VMEM)."""
    try:
        cap = getattr(pltpu.get_tpu_info(), "vmem_capacity_bytes", None)
        if cap:
            return int(cap) * 3 // 4
    except Exception:
        pass  # narrow fallback: only the hardware query, never the kernels
    return 48 * 1024 * 1024   # fits v7x (64 MiB/TC) and v5e/v6e (128 MiB)


# ----------------------------------------------------------------------------
# Host-side construction of the constant (factored) pooling / upsample operators.
# ----------------------------------------------------------------------------
def adaptive_avg_pool_matrix(out_size, in_size):
    """1-D operator of nn.AdaptiveAvgPool (PyTorch bin rule)."""
    P = np.zeros((out_size, in_size), dtype=np.float32)
    for i in range(out_size):
        start = (i * in_size) // out_size
        end = -((-(i + 1) * in_size) // out_size)  # ceil
        P[i, start:end] = 1.0 / (end - start)
    return P


def bilinear_upsample_matrix(out_size, in_size):
    """1-D operator of F.upsample(mode='bilinear'), align_corners=False."""
    # TODO(synk): pre-0.4.0 F.upsample behaved as align_corners=True; switch this
    # builder if bit-matching an old checkpointed PSPNet is required.
    A = np.zeros((out_size, in_size), dtype=np.float32)
    scale = in_size / out_size
    for o in range(out_size):
        src = max((o + 0.5) * scale - 0.5, 0.0)
        i0 = min(int(np.floor(src)), in_size - 1)
        i1 = min(i0 + 1, in_size - 1)
        w1 = src - i0
        A[o, i0] += 1.0 - w1
        A[o, i1] += w1
    return A


def build_factored_operators(H, W, sizes=SIZES):
    """Factored spatial operators with compact per-stage padding.

    Returns:
      P_cat : (PTOT, HW) stacked pooling operators kron(Ph_s, Pw_s); each stage's
              s*s rows padded (with zeros) to a multiple of 8, cumulative offsets.
      A_cat : (HW, PTOT) stacked upsample operators kron(Ah_s, Aw_s), same layout.
      offs  : per-stage row offsets into PTOT.
      pads  : per-stage padded row counts (multiples of 8).
      per_axis: 1-D factors per stage, for the pure-JAX reference.
    """
    HW = H * W
    pads = [_round_up(s * s, 8) for s in sizes]
    PTOT = int(sum(pads))                      # 8+8+16+40 = 72 for (1,2,3,6)
    P_cat = np.zeros((PTOT, HW), dtype=np.float32)
    A_cat = np.zeros((HW, PTOT), dtype=np.float32)
    per_axis, offs = [], []
    off = 0
    for s, pad in zip(sizes, pads):
        Ph = adaptive_avg_pool_matrix(s, H)
        Pw = adaptive_avg_pool_matrix(s, W)
        Ah = bilinear_upsample_matrix(H, s)
        Aw = bilinear_upsample_matrix(W, s)
        P_cat[off:off + s * s, :] = np.kron(Ph, Pw)   # (s*s, HW)
        A_cat[:, off:off + s * s] = np.kron(Ah, Aw)   # (HW, s*s)
        per_axis.append((Ph, Pw, Ah, Aw))
        offs.append(off)
        off += pad
    return P_cat, A_cat, offs, pads, per_axis


# ----------------------------------------------------------------------------
# Kernel 1: reduction-tiled adaptive pooling  pooled = P_cat @ x  (per batch).
# ----------------------------------------------------------------------------
def pool_kernel(x_ref, p_ref, pooled_ref):
    # x_ref     : (HWT, CT)   bf16  spatial/channel tile of one batch element
    # p_ref     : (PTOT, HWT) bf16  stacked pooling-operator columns for this tile
    # pooled_ref: (PTOT, CT)  f32   resident across the HW ("arbitrary") grid axis
    @pl.when(pl.program_id(2) == 0)
    def _():
        pooled_ref[...] = jnp.zeros_like(pooled_ref)
    pooled_ref[...] += jnp.dot(p_ref[...], x_ref[...],
                               preferred_element_type=jnp.float32)


# ----------------------------------------------------------------------------
# Kernel 2: bottleneck over an HW tile: relu(x@W_id + A@prior + bias).
# ----------------------------------------------------------------------------
def bottleneck_kernel(x_ref, a_ref, prior_ref, wid_ref, b_ref, o_ref):
    # x_ref    : (HWT, CP)    bf16
    # a_ref    : (HWT, PTOT)  bf16  upsample-operator rows for this tile
    # prior_ref: (PTOT, OUTP) bf16  per-batch priors (pool + folded stage conv)
    # wid_ref  : (CP, OUTP)   bf16  identity-branch bottleneck slab (VMEM-resident)
    # b_ref    : (1, OUTP)    f32   bottleneck bias (VMEM-resident)
    # o_ref    : (HWT, OUTP)  bf16
    acc = jnp.dot(x_ref[...], wid_ref[...], preferred_element_type=jnp.float32)
    acc = acc + jnp.dot(a_ref[...], prior_ref[...],
                        preferred_element_type=jnp.float32)
    o_ref[...] = jnp.maximum(acc + b_ref[...], 0.0).astype(o_ref.dtype)


# ----------------------------------------------------------------------------
# Wrapper.
# ----------------------------------------------------------------------------
def psp_forward(x_nchw, stage_w, wb, bias, *, sizes=SIZES, out_dtype=jnp.bfloat16):
    """PSPModule forward. stage_w: (S, C, C) per-stage 1x1 conv as (C_in, C_out);
    wb: ((S+1)*C, OUT) bottleneck 1x1 conv as (C_in_total, C_out); bias: (OUT,)."""
    N, C, H, W = x_nchw.shape
    S = len(sizes)
    OUT = wb.shape[-1]
    HW = H * W
    vmem_limit = _vmem_limit_bytes()

    # Lane-dense channel dims (multiples of 128; no-op when already aligned,
    # e.g. C=2048 / OUT=1024 in real PSPNet) and MXU-friendly spatial tiles.
    CP = _round_up(C, 128)
    OUTP = _round_up(OUT, 128)
    if HW >= 512:
        HWT = 512
    elif HW >= 256:
        HWT = 256
    else:
        HWT = _round_up(HW, 16)            # 16: bf16 sublane packing
    HWP = _round_up(HW, HWT)
    n_hw_tiles = HWP // HWT
    CT = 512 if CP % 512 == 0 else CP      # channel tiling for kernel 1
    n_c_tiles = CP // CT

    P_np, A_np, offs, pads, _ = build_factored_operators(H, W, sizes)
    PTOT = P_np.shape[0]

    # Pad the spatial axis of the operators (zero rows/cols -> no contribution).
    P_pad = np.zeros((PTOT, HWP), np.float32); P_pad[:, :HW] = P_np
    A_pad = np.zeros((HWP, PTOT), np.float32); A_pad[:HW, :] = A_np
    P_b = jnp.asarray(P_pad, dtype=jnp.bfloat16)
    A_b = jnp.asarray(A_pad, dtype=jnp.bfloat16)

    # Fold each stage's 1x1 conv into its bottleneck weight slab (f32, tiny).
    wb3 = wb.reshape(S + 1, C, OUT)
    wfold = jnp.einsum('sij,sjo->sio', stage_w, wb3[:S])            # (S, C, OUT)
    wfold_p = jnp.pad(wfold, ((0, 0), (0, CP - C), (0, OUTP - OUT)))  # f32
    wid_p = jnp.pad(wb3[S], ((0, CP - C), (0, OUTP - OUT))).astype(jnp.bfloat16)
    bias_p = jnp.pad(bias, (0, OUTP - OUT)).reshape(1, OUTP).astype(jnp.float32)

    # NCHW -> (N, HWP, CP): cast to bf16 *before* transpose/pad (half the traffic).
    x_flat = jnp.transpose(x_nchw.astype(jnp.bfloat16), (0, 2, 3, 1)).reshape(N, HW, C)
    if HWP != HW or CP != C:
        x_p = jnp.pad(x_flat, ((0, 0), (0, HWP - HW), (0, CP - C)))
    else:
        x_p = x_flat

    # ---- Kernel 1: per-batch pooled tensor (reduction-tiled over HW). -------
    pooled = pl.pallas_call(
        pool_kernel,
        out_shape=jax.ShapeDtypeStruct((N, PTOT, CP), jnp.float32),
        grid_spec=pltpu.PrefetchScalarGridSpec(
            num_scalar_prefetch=0,
            grid=(N, n_c_tiles, n_hw_tiles),
            in_specs=[
                pl.BlockSpec((_SQ, HWT, CT), lambda n, c, t: (n, t, c)),
                pl.BlockSpec((PTOT, HWT), lambda n, c, t: (0, t)),
            ],
            out_specs=pl.BlockSpec((_SQ, PTOT, CT), lambda n, c, t: (n, 0, c)),
        ),
        compiler_params=pltpu.CompilerParams(
            dimension_semantics=("parallel", "parallel", "arbitrary"),
            vmem_limit_bytes=vmem_limit),
    )(x_p, P_b)

    # ---- Per-stage fold (tiny GEMMs): prior_s = pooled_s @ Wfold_s, in XLA/f32.
    prior_blocks = []
    for s in range(S):
        blk = jax.lax.dynamic_slice_in_dim(pooled, offs[s], pads[s], axis=1)
        prior_blocks.append(jnp.einsum('npc,co->npo', blk, wfold_p[s]))
    prior = jnp.concatenate(prior_blocks, axis=1).astype(jnp.bfloat16)  # (N,PTOT,OUTP)

    # ---- Kernel 2: tiled bottleneck + bias + ReLU. ---------------------------
    # NOTE: padded HW rows of out_p contain relu(bias); they are sliced off below
    # and must never be consumed directly.
    out_p = pl.pallas_call(
        bottleneck_kernel,
        out_shape=jax.ShapeDtypeStruct((N, HWP, OUTP), out_dtype),
        grid_spec=pltpu.PrefetchScalarGridSpec(
            num_scalar_prefetch=0,
            grid=(N, n_hw_tiles),
            in_specs=[
                pl.BlockSpec((_SQ, HWT, CP), lambda n, t: (n, t, 0)),
                pl.BlockSpec((HWT, PTOT), lambda n, t: (t, 0)),
                pl.BlockSpec((_SQ, PTOT, OUTP), lambda n, t: (n, 0, 0)),
                # Grid-invariant weights: whole-array VMEM residency (single
                # copy, no per-step DMA, no double buffering).
                pl.BlockSpec(memory_space=pltpu.MemorySpace.VMEM),
                pl.BlockSpec(memory_space=pltpu.MemorySpace.VMEM),
            ],
            out_specs=pl.BlockSpec((_SQ, HWT, OUTP), lambda n, t: (n, t, 0)),
        ),
        compiler_params=pltpu.CompilerParams(
            dimension_semantics=("parallel", "parallel"),
            vmem_limit_bytes=vmem_limit),
    )(x_p, A_b, prior, wid_p, bias_p)

    out = out_p[:, :HW, :OUT]                                      # drop padding
    out = jnp.transpose(out.reshape(N, H, W, OUT), (0, 3, 1, 2))   # back to NCHW
    return out    # stays in out_dtype; caller syncs / casts if needed


# ----------------------------------------------------------------------------
# Pure-JAX f32 reference (mirrors the PyTorch forward op-by-op) for validation.
# ----------------------------------------------------------------------------
def psp_reference(x_nchw, per_axis_ops, stage_w, wb, bias):
    priors = []
    for s, (Ph, Pw, Ah, Aw) in enumerate(per_axis_ops):
        pooled = jnp.einsum('ph,nchw,qw->ncpq', Ph, x_nchw, Pw)   # AdaptiveAvgPool2d
        conv = jnp.einsum('ncpq,cd->ndpq', pooled, stage_w[s])    # 1x1 conv, no bias
        up = jnp.einsum('hp,ndpq,wq->ndhw', Ah, conv, Aw)         # bilinear upsample
        priors.append(up)
    priors.append(x_nchw)
    cat = jnp.concatenate(priors, axis=1)                         # (N, (S+1)C, H, W)
    out = jnp.einsum('nkhw,ko->nohw', cat, wb) + bias[None, :, None, None]
    return jnp.maximum(out, 0.0)


if __name__ == "__main__":
    N, C, H, W = 2, 4, 16, 16      # small synthetic shapes (features = C)
    OUT = 32                       # small stand-in for out_features=1024
    S = len(SIZES)

    keys = jax.random.split(jax.random.PRNGKey(0), 4)
    x = jax.random.normal(keys[0], (N, C, H, W), dtype=jnp.float32)
    # Conv2d(features, features, 1, bias=False) per stage, stored as (C_in, C_out).
    stage_w = 0.3 * jax.random.normal(keys[1], (S, C, C), dtype=jnp.float32)
    # Bottleneck Conv2d((S+1)*C, OUT, 1) weight as (C_in_total, C_out) + bias.
    wb = 0.2 * jax.random.normal(keys[2], ((S + 1) * C, OUT), dtype=jnp.float32)
    bias = 0.1 * jax.random.normal(keys[3], (OUT,), dtype=jnp.float32)

    out = psp_forward(x, stage_w, wb, bias)
    out = jax.block_until_ready(out)

    _, _, _, _, per_axis = build_factored_operators(H, W, SIZES)
    ref = jax.block_until_ready(psp_reference(x, per_axis, stage_w, wb, bias))
    # bf16 MXU operands / bf16 output with f32 accumulation -> bf16 tolerance.
    np.testing.assert_allclose(np.asarray(out, dtype=np.float32), np.asarray(ref),
                               rtol=5e-2, atol=5e-2)

    print("KERNEL_OK")
</pallas_src>

<mosaic_0001>
module attributes {stable_mosaic.version = 11 : i64} {
  func.func @pool_kernel(%arg0: i32, %arg1: i32, %arg2: i32, %arg3: memref<1x256x128xbf16, #tpu.memory_space<vmem>>, %arg4: memref<72x256xbf16, #tpu.memory_space<vmem>>, %arg5: memref<1x72x128xf32, #tpu.memory_space<vmem>>) attributes {dimension_semantics = [#tpu.dimension_semantics<parallel>, #tpu.dimension_semantics<parallel>, #tpu.dimension_semantics<arbitrary>], iteration_bounds = array<i64: 2, 1, 1>, scalar_prefetch = 0 : i64, scratch_operands = 0 : i64, tpu.core_type = #tpu.core_type<tc>, window_params = [{transform_indices = @transform_0, window_bounds = array<i64: 1, 256, 128>}, {transform_indices = @transform_1, window_bounds = array<i64: 72, 256>}, {transform_indices = @transform_2, window_bounds = array<i64: 1, 72, 128>}]} {
    %c0_i32 = arith.constant 0 : i32
    %0 = arith.cmpi eq, %arg2, %c0_i32 : i32
    %1 = arith.extui %0 : i1 to i32
    %c0_i32_0 = arith.constant 0 : i32
    %2 = arith.cmpi ne, %1, %c0_i32_0 : i32
    scf.if %2 {
      %cst_11 = arith.constant 0.000000e+00 : f32
      %13 = vector.broadcast %cst_11 : f32 to vector<72x128xf32>
      %c0_12 = arith.constant 0 : index
      %c0_13 = arith.constant 0 : index
      %c0_14 = arith.constant 0 : index
      %14 = vector.load %arg5[%c0_12, %c0_13, %c0_14] : memref<1x72x128xf32, #tpu.memory_space<vmem>>, vector<1x72x128xf32>
      %15 = vector.shape_cast %14 : vector<1x72x128xf32> to vector<72x128xf32>
      %16 = vector.shape_cast %13 : vector<72x128xf32> to vector<1x72x128xf32>
      tpu.vector_store %arg5[%c0_12, %c0_13, %c0_14], %16 {strides = array<i32>} : memref<1x72x128xf32, #tpu.memory_space<vmem>>, vector<1x72x128xf32>,
    } else {
    }
    %c0 = arith.constant 0 : index
    %c0_1 = arith.constant 0 : index
    %c0_2 = arith.constant 0 : index
    %3 = vector.load %arg5[%c0, %c0_1, %c0_2] : memref<1x72x128xf32, #tpu.memory_space<vmem>>, vector<1x72x128xf32>
    %4 = vector.shape_cast %3 : vector<1x72x128xf32> to vector<72x128xf32>
    %c0_3 = arith.constant 0 : index
    %c0_4 = arith.constant 0 : index
    %5 = vector.load %arg4[%c0_3, %c0_4] : memref<72x256xbf16, #tpu.memory_space<vmem>>, vector<72x256xbf16>
    %c0_5 = arith.constant 0 : index
    %c0_6 = arith.constant 0 : index
    %c0_7 = arith.constant 0 : index
    %6 = vector.load %arg3[%c0_5, %c0_6, %c0_7] : memref<1x256x128xbf16, #tpu.memory_space<vmem>>, vector<1x256x128xbf16>
    %7 = vector.shape_cast %6 : vector<1x256x128xbf16> to vector<256x128xbf16>
    %cst = arith.constant dense<0.000000e+00> : vector<72x128xf32>
    %8 = tpu.matmul %5, %7, %cst {dimension_numbers = #tpu.dot_dimension_numbers<[1], [0], [0], [1], [0, 0, 1, 1], [], []>} : vector<72x256xbf16>, vector<256x128xbf16>, vector<72x128xf32> -> vector<72x128xf32>
    %9 = arith.addf %4, %8 : vector<72x128xf32>
    %c0_8 = arith.constant 0 : index
    %c0_9 = arith.constant 0 : index
    %c0_10 = arith.constant 0 : index
    %10 = vector.load %arg5[%c0_8, %c0_9, %c0_10] : memref<1x72x128xf32, #tpu.memory_space<vmem>>, vector<1x72x128xf32>
    %11 = vector.shape_cast %10 : vector<1x72x128xf32> to vector<72x128xf32>
    %12 = vector.shape_cast %9 : vector<72x128xf32> to vector<1x72x128xf32>
    tpu.vector_store %arg5[%c0_8, %c0_9, %c0_10], %12 {strides = array<i32>} : memref<1x72x128xf32, #tpu.memory_space<vmem>>, vector<1x72x128xf32>,
    return
  }
  func.func @transform_0(%arg0: i32, %arg1: i32, %arg2: i32) -> (i32, i32, i32) {
    %c0_i32 = arith.constant 0 : i32
    return %arg0, %arg2, %arg1 : i32, i32, i32
  }
  func.func @transform_1(%arg0: i32, %arg1: i32, %arg2: i32) -> (i32, i32) {
    %c0_i32 = arith.constant 0 : i32
    %c0_i32_0 = arith.constant 0 : i32
    return %c0_i32, %arg2 : i32, i32
  }
  func.func @transform_2(%arg0: i32, %arg1: i32, %arg2: i32) -> (i32, i32, i32) {
    %c0_i32 = arith.constant 0 : i32
    %c0_i32_0 = arith.constant 0 : i32
    return %arg0, %c0_i32, %arg1 : i32, i32, i32
  }
}

</mosaic_0001>

<llo_original>
// kernel: tpu_custom_call.1
$region0: #{tpu_custom_call.1}
  #allocation0 [shape = 'u32[]', space=smem, size = 0x4, offset = 0x4, fixed_abs, tag = 'smem constant byte address 0x4 - core index']
  #allocation1 [shape = 'u32[72,128]{1,0:T(1,128)}', space=vmem, size = 0x9000, scoped, tag = 'internal scratch']
  %s0 = inlined_call_operand.hbm [shape: bf16[2,256,128], index: 0, kind: input, shape index: {}]
  %s1 = inlined_call_operand.hbm [shape: bf16[72,256], index: 1, kind: input, shape index: {}]
  %s2 = inlined_call_operand.hbm [shape: f32[2,72,128], index: 2, kind: output, shape index: {}]
  %s3 = sld [smem:[#allocation0]]
  $region53: #{tpu_custom_call.1} parent=0
    _
  %s5 = ssub.s32 1, %s3
  %s6 = scalar_select 0, %s5, %s3
  $region1: #{tpu_custom_call.1} parent=0
    #allocation2 [shape = 'u8[131072]{0}', space=vmem, size = 0x20000, scoped, tag = 'input window, operand 0']
    #allocation3 [shape = 's32[2]{0}', space=sflag, size = 0x8, scoped, tag = 'scoped memory for tpu_custom_call.1']
    #allocation4 [shape = 's32[2]{0}', space=sflag, size = 0x8, scoped, tag = 'scoped memory for tpu_custom_call.1']
    #allocation5 [shape = 'u8[36864]{0}', space=vmem, size = 0x9000, scoped, tag = 'input window, operand 1, single buffered']
    #allocation6 [shape = 's32[1]{0}', space=sflag, size = 0x4, scoped, tag = 'scoped memory for tpu_custom_call.1']
    #allocation7 [shape = 'u8[73728]{0}', space=vmem, size = 0x12000, scoped, tag = 'output window, operand 0']
    %7 = vsyncpa [#allocation3], 0
    %s8 = scalar_lea.sflag [#allocation3], 1
    %9 = vsyncpa %s8, 0
    %10 = vsyncpa [#allocation6], 0
    %11 = vsyncpa [#allocation4], 0
    %s12 = scalar_lea.sflag [#allocation4], 1
    %13 = vsyncpa %s12, 0
    loop: start=0, step=1, limit=4
    $region2: #{tpu_custom_call.1} parent=1 // loop_pre_header
      _
    $region3: #{tpu_custom_call.1} parent=1 // loop_header
      %s15 = sphi 0, %s19
      %p16 = scmp.ge.s32.totalorder %s15, 4
      %s22 = sphi 0, %s41
      %s23 = sphi 0, %s37
      %s24 = sphi 0, %s33
      %s25 = sphi 0, %s22
      %s26 = sphi 0, %s23
      %s27 = sphi 0, %s24
      %s28 = sphi 0, %s25
      %s29 = sphi 0, %s26
      %s30 = sphi 0, %s27
      %s48 = sphi 0, %s50
      %s51 = sphi 0, %s48
      %s52 = sphi 0, %s51
      %s68 = sphi 0, %s52
      %s74 = sphi 0, %s76
      %s77 = sphi 0, %s74
      %s78 = sphi 0, %s77
      %s94 = sphi 0, %s78
      %s102 = sphi 0, %s104
      %s105 = sphi 0, %s102
      %s106 = sphi 0, %s105
      %s122 = sphi 0, %s106
    $region4: #{tpu_custom_call.1} parent=1 // loop_header_branch
      %18 = sbr.rel (%p16) target = $region8
    $region5: #{tpu_custom_call.1} parent=1 // loop_body
      %s20 = ssub.s32 %s15, 1
      %s21 = ssub.s32 %s15, 2
      %s31 = sadd.s32 1, %s24
      %p32 = scmp.ge.s32.totalorder %s31, 1
      %s33 = scalar_select %p32, 0, %s31
      %s34 = sadd.s32 1, %s23
      %s35 = scalar_select %p32, %s34, %s23
      %p36 = scmp.ge.s32.totalorder %s35, 1
      %s37 = scalar_select %p36, 0, %s35
      %s38 = sadd.s32 1, %s22
      %s39 = scalar_select %p36, %s38, %s22
      %p40 = scmp.ge.s32.totalorder %s39, 2
      %s41 = scalar_select %p40, 0, %s39
      %s42 = ssub.s32 %s22, %s41
      %s43 = ssub.s32 %s24, %s33
      %s44 = sor.u32 %s42, %s43
      %s45 = ssub.s32 %s23, %s37
      %s46 = sor.u32 %s44, %s45
      %p47 = scmp.eq.s32.totalorder %s46, 0
      %s49 = sadd.s32 %s48, 1
      %s50 = scalar_select %p47, %s48, %s49
      %p53 = pneg %p47
      %p54 = scmp.eq.s32.totalorder %s15, 1
      %p55 = por %p53, %p54
      %p56 = scmp.ne.s32.totalorder %s48, %s51
      %p57 = scmp.eq.s32.totalorder %s15, 0
      %p58 = por %p56, %p57
      %p59 = scmp.ne.s32.totalorder %s48, %s51
      %p60 = scmp.eq.s32.totalorder %s20, 1
      %p61 = por %p59, %p60
      %p62 = scmp.ne.s32.totalorder %s51, %s52
      %p63 = scmp.eq.s32.totalorder %s20, 0
      %p64 = por %p62, %p63
      %p65 = scmp.ne.s32.totalorder %s51, %s52
      %p66 = scmp.eq.s32.totalorder %s21, 1
      %p67 = por %p65, %p66
      %p69 = scmp.ne.s32.totalorder %s52, %s68
      %p70 = scmp.eq.s32.totalorder %s21, 0
      %p71 = por %p69, %p70
      %s72 = ssub.s32 %s24, %s33
      %p73 = scmp.eq.s32.totalorder %s72, 0
      %s75 = sadd.s32 %s74, 1
      %s76 = scalar_select %p73, %s74, %s75
      %p79 = pneg %p73
      %p80 = scmp.eq.s32.totalorder %s15, 1
      %p81 = por %p79, %p80
      %p82 = scmp.ne.s32.totalorder %s74, %s77
      %p83 = scmp.eq.s32.totalorder %s15, 0
      %p84 = por %p82, %p83
      %p85 = scmp.ne.s32.totalorder %s74, %s77
      %p86 = scmp.eq.s32.totalorder %s20, 1
      %p87 = por %p85, %p86
      %p88 = scmp.ne.s32.totalorder %s77, %s78
      %p89 = scmp.eq.s32.totalorder %s20, 0
      %p90 = por %p88, %p89
      %p91 = scmp.ne.s32.totalorder %s77, %s78
      %p92 = scmp.eq.s32.totalorder %s21, 1
      %p93 = por %p91, %p92
      %p95 = scmp.ne.s32.totalorder %s78, %s94
      %p96 = scmp.eq.s32.totalorder %s21, 0
      %p97 = por %p95, %p96
      %s98 = ssub.s32 %s22, %s41
      %s99 = ssub.s32 %s23, %s37
      %s100 = sor.u32 %s98, %s99
      %p101 = scmp.eq.s32.totalorder %s100, 0
      %s103 = sadd.s32 %s102, 1
      %s104 = scalar_select %p101, %s102, %s103
      %p107 = pneg %p101
      %p108 = scmp.eq.s32.totalorder %s15, 1
      %p109 = por %p107, %p108
      %p110 = scmp.ne.s32.totalorder %s102, %s105
      %p111 = scmp.eq.s32.totalorder %s15, 0
      %p112 = por %p110, %p111
      %p113 = scmp.ne.s32.totalorder %s102, %s105
      %p114 = scmp.eq.s32.totalorder %s20, 1
      %p115 = por %p113, %p114
      %p116 = scmp.ne.s32.totalorder %s105, %s106
      %p117 = scmp.eq.s32.totalorder %s20, 0
      %p118 = por %p116, %p117
      %p119 = scmp.ne.s32.totalorder %s105, %s106
      %p120 = scmp.eq.s32.totalorder %s21, 1
      %p121 = por %p119, %p120
      %p123 = scmp.ne.s32.totalorder %s106, %s122
      %p124 = scmp.eq.s32.totalorder %s21, 0
      %p125 = por %p123, %p124
      %p126 = scmp.le.s32.totalorder 1, %s15
      %p127 = scmp.lt.s32.totalorder %s15, 3
      %p128 = pnand %p126, %p127
      %p129 = pneg %p128
      // Predicated region
      $region9: #{tpu_custom_call.1} parent=5 // pred_check
        _
      $region10: #{tpu_custom_call.1} parent=5 // pred_check_branch
        %131 = sbr.rel (%p128) target = $region12
      $region11: #{tpu_custom_call.1} parent=5 // pred_region
        %s132 = ssub.s32 %s15, 1
        // Predicated region
        $region13: #{tpu_custom_call.1} parent=11 // pred_check
          %p133 = pneg %p90
        $region14: #{tpu_custom_call.1} parent=11 // pred_check_branch
          %135 = sbr.rel (%p133) target = $region16
        $region15: #{tpu_custom_call.1} parent=11 // pred_region
          %s136 = smul.u32 2, %s27
          %138 = vsyncadd [#allocation6], 0
          %s139 = smul.addr %s136, 4
          %s140 = scalar_lea.hbm %s1, %s139
          %s141 = sshll.u32 %s140, 4
          %s142 = int_to_ptr.hbm [resolvable:$true] %s141
          %s143 = sshll.u32 [#allocation5], 4
          %s144 = int_to_ptr.vmem [resolvable:$true] %s143
          %149 = dma.hbm_to_vmem [thread:$0]  %s142, 1152, %s144, [#allocation6], 128, 128, 8
        $region16: #{tpu_custom_call.1} parent=11 // pred_fallthru
          _
      $region12: #{tpu_custom_call.1} parent=5 // pred_fallthru
        _
      %p150 = scmp.lt.s32.totalorder %s15, 2
      // Predicated region
      $region17: #{tpu_custom_call.1} parent=5 // pred_check
        %p151 = pneg %p150
      $region18: #{tpu_custom_call.1} parent=5 // pred_check_branch
        %153 = sbr.rel (%p151) target = $region20
      $region19: #{tpu_custom_call.1} parent=5 // pred_region
        // Predicated region
        $region21: #{tpu_custom_call.1} parent=19 // pred_check
          %p154 = pneg %p58
        $region22: #{tpu_custom_call.1} parent=19 // pred_check_branch
          %156 = sbr.rel (%p154) target = $region24
        $region23: #{tpu_custom_call.1} parent=19 // pred_region
          %s157 = sand.u32 %s48, 1
          %s158 = scalar_lea.sflag [#allocation3], %s157
          %s159 = sand.u32 %s48, 1
          %s160 = smul.addr %s159, 128
          %s161 = scalar_lea.vmem [#allocation2], %s160
          %s162 = smul.u32 32, %s24
          %164 = vsyncadd %s158, 0
          %s165 = sadd.s32 %s23, %s162
          %s166 = smul.addr %s22, 32
          %s167 = sadd.s32 %s165, %s166
          %s168 = smul.addr %s167, 4
          %s169 = scalar_lea.hbm %s0, %s168
          %s170 = sshll.u32 %s169, 4
          %s171 = int_to_ptr.hbm [resolvable:$true] %s170
          %s172 = sshll.u32 %s161, 4
          %s173 = int_to_ptr.vmem [resolvable:$true] %s172
          %178 = dma.hbm_to_vmem [thread:$0]  %s171, 2048, %s173, %s158, 64, 64, 4
        $region24: #{tpu_custom_call.1} parent=19 // pred_fallthru
          _
      $region20: #{tpu_custom_call.1} parent=5 // pred_fallthru
        _
      %p179 = scmp.le.s32.totalorder 1, %s15
      %p180 = scmp.lt.s32.totalorder %s15, 3
      %p181 = pnand %p179, %p180
      %p182 = pneg %p181
      // Predicated region
      $region25: #{tpu_custom_call.1} parent=5 // pred_check
        _
      $region26: #{tpu_custom_call.1} parent=5 // pred_check_branch
        %184 = sbr.rel (%p181) target = $region28
      $region27: #{tpu_custom_call.1} parent=5 // pred_region
        %s185 = ssub.s32 %s15, 1
        %s186 = sand.u32 %s51, 1
        %s187 = scalar_lea.sflag [#allocation3], %s186
        %s188 = sand.u32 %s51, 1
        %s189 = smul.addr %s188, 128
        %s190 = scalar_lea.vmem [#allocation2], %s189
        // Predicated region
        $region29: #{tpu_custom_call.1} parent=27 // pred_check
          %p191 = pneg %p64
        $region30: #{tpu_custom_call.1} parent=27 // pred_check_branch
          %193 = sbr.rel (%p191) target = $region32
        $region31: #{tpu_custom_call.1} parent=27 // pred_region
          %195 = dma.done %s187, 2048
        $region32: #{tpu_custom_call.1} parent=27 // pred_fallthru
          _
        // Predicated region
        $region33: #{tpu_custom_call.1} parent=27 // pred_check
          %p196 = pneg %p90
        $region34: #{tpu_custom_call.1} parent=27 // pred_check_branch
          %198 = sbr.rel (%p196) target = $region36
        $region35: #{tpu_custom_call.1} parent=27 // pred_region
          %200 = dma.done [#allocation6], 1152
        $region36: #{tpu_custom_call.1} parent=27 // pred_fallthru
          _
        %s201 = sand.u32 %s51, 1
        %s202 = scalar_lea.sflag [#allocation3], %s201
        %s203 = sand.u32 %s51, 1
        %s204 = smul.addr %s203, 128
        %s205 = scalar_lea.vmem [#allocation2], %s204
        %p206 = pneg %p64
        %p207 = pneg %p61
        %p208 = pneg %p90
        %p209 = pneg %p87
        %p210 = pneg %p118
        %p211 = pneg %p115
        %s212 = sand.u32 %s105, 1
        %s213 = scalar_lea.sflag [#allocation4], %s212
        %s214 = sand.u32 %s105, 1
        %s215 = smul.addr %s214, 72
        %s216 = scalar_lea.vmem [#allocation7], %s215
        %s217 = smul.u32 32, %s27
        %s218 = smul.u32 2, %s27
        %p219 = scmp.eq.s32.totalorder %s27, 0
        // Predicated region
        $region37: #{tpu_custom_call.1} parent=27 // pred_check
          %p220 = pneg %p219
        $region38: #{tpu_custom_call.1} parent=27 // pred_check_branch
          %222 = sbr.rel (%p220) target = $region40
        $region39: #{tpu_custom_call.1} parent=27 // pred_region
          %223 = vst [vmem:[%s216] sm:$0xff] 0.0
          %224 = vst [vmem:[%s216 + $0x8] sm:$0xff] 0.0
          %225 = vst [vmem:[%s216 + $0x10] sm:$0xff] 0.0
          %226 = vst [vmem:[%s216 + $0x18] sm:$0xff] 0.0
          %227 = vst [vmem:[%s216 + $0x20] sm:$0xff] 0.0
          %228 = vst [vmem:[%s216 + $0x28] sm:$0xff] 0.0
          %229 = vst [vmem:[%s216 + $0x30] sm:$0xff] 0.0
          %230 = vst [vmem:[%s216 + $0x38] sm:$0xff] 0.0
          %231 = vst [vmem:[%s216 + $0x40] sm:$0xff] 0.0
        $region40: #{tpu_custom_call.1} parent=27 // pred_fallthru
          _
        %v232 = vld [vmem:[%s216] sm:$0xff]
        %v233 = vld [vmem:[%s216 + $0x8] sm:$0xff]
        %v234 = vld [vmem:[%s216 + $0x10] sm:$0xff]
        %v235 = vld [vmem:[%s216 + $0x18] sm:$0xff]
        %v236 = vld [vmem:[%s216 + $0x20] sm:$0xff]
        %v237 = vld [vmem:[%s216 + $0x28] sm:$0xff]
        %v238 = vld [vmem:[%s216 + $0x30] sm:$0xff]
        %v239 = vld [vmem:[%s216 + $0x38] sm:$0xff]
        %v240 = vld [vmem:[%s216 + $0x40] sm:$0xff]
        %v241 = vld [vmem:[#allocation5] sm:$0xff]
        %v242 = vld [vmem:[#allocation5 + $0x8] sm:$0xff]
        %v243 = vld [vmem:[#allocation5 + $0x10] sm:$0xff]
        %v244 = vld [vmem:[#allocation5 + $0x18] sm:$0xff]
        %v245 = vld [vmem:[#allocation5 + $0x20] sm:$0xff]
        %v246 = vld [vmem:[#allocation5 + $0x28] sm:$0xff]
        %v247 = vld [vmem:[#allocation5 + $0x30] sm:$0xff]
        %v248 = vld [vmem:[#allocation5 + $0x38] sm:$0xff]
        %v249 = vld [vmem:[#allocation5 + $0x40] sm:$0xff]
        %v250 = vld [vmem:[%s190] sm:$0xf]
        %v251 = vld [vmem:[%s190 + $0x4] sm:$0xf]
        %v252 = vld [vmem:[%s190 + $0x8] sm:$0xf]
        %v253 = vld [vmem:[%s190 + $0xc] sm:$0xf]
        %v254 = vld [vmem:[%s190 + $0x10] sm:$0xf]
        %v255 = vld [vmem:[%s190 + $0x14] sm:$0xf]
        %v256 = vld [vmem:[%s190 + $0x18] sm:$0xf]
        %v257 = vld [vmem:[%s190 + $0x1c] sm:$0xf]
        %v258 = vld [vmem:[%s190 + $0x20] sm:$0xf]
        %v259 = vld [vmem:[%s190 + $0x24] sm:$0xf]
        %v260 = vld [vmem:[%s190 + $0x28] sm:$0xf]
        %v261 = vld [vmem:[%s190 + $0x2c] sm:$0xf]
        %v262 = vld [vmem:[%s190 + $0x30] sm:$0xf]
        %v263 = vld [vmem:[%s190 + $0x34] sm:$0xf]
        %v264 = vld [vmem:[%s190 + $0x38] sm:$0xf]
        %v265 = vld [vmem:[%s190 + $0x3c] sm:$0xf]
        %v266 = vld [vmem:[%s190 + $0x40] sm:$0xf]
        %v267 = vld [vmem:[%s190 + $0x44] sm:$0xf]
        %v268 = vld [vmem:[%s190 + $0x48] sm:$0xf]
        %v269 = vld [vmem:[%s190 + $0x4c] sm:$0xf]
        %v270 = vld [vmem:[%s190 + $0x50] sm:$0xf]
        %v271 = vld [vmem:[%s190 + $0x54] sm:$0xf]
        %v272 = vld [vmem:[%s190 + $0x58] sm:$0xf]
        %v273 = vld [vmem:[%s190 + $0x5c] sm:$0xf]
        %v274 = vld [vmem:[%s190 + $0x60] sm:$0xf]
        %v275 = vld [vmem:[%s190 + $0x64] sm:$0xf]
        %v276 = vld [vmem:[%s190 + $0x68] sm:$0xf]
        %v277 = vld [vmem:[%s190 + $0x6c] sm:$0xf]
        %v278 = vld [vmem:[%s190 + $0x70] sm:$0xf]
        %v279 = vld [vmem:[%s190 + $0x74] sm:$0xf]
        %v280 = vld [vmem:[%s190 + $0x78] sm:$0xf]
        %v281 = vld [vmem:[%s190 + $0x7c] sm:$0xf]
        %v291 = vunpack.c.l.b16 %v241
        %v292 = vunpack.c.h.b16 %v241
        %v293 = vunpack.c.l.b16 %v242
        %v294 = vunpack.c.h.b16 %v242
        %v295 = vunpack.c.l.b16 %v243
        %v296 = vunpack.c.h.b16 %v243
        %v297 = vunpack.c.l.b16 %v244
        %v298 = vunpack.c.h.b16 %v244
        %v299 = vunpack.c.l.b16 %v245
        %v300 = vunpack.c.h.b16 %v245
        %v301 = vunpack.c.l.b16 %v246
        %v302 = vunpack.c.h.b16 %v246
        %v303 = vunpack.c.l.b16 %v247
        %v304 = vunpack.c.h.b16 %v247
        %v305 = vunpack.c.l.b16 %v248
        %v306 = vunpack.c.h.b16 %v248
        %v307 = vunpack.c.l.b16 %v249
        %v308 = vunpack.c.h.b16 %v249
        %v309 = vpack.c.b16 %v293, %v291
        %v310 = vpack.c.b16 %v294, %v292
        %v311 = vpack.c.b16 %v297, %v295
        %v312 = vpack.c.b16 %v298, %v296
        %v313 = vpack.c.b16 %v301, %v299
        %v314 = vpack.c.b16 %v302, %v300
        %v315 = vpack.c.b16 %v305, %v303
        %v316 = vpack.c.b16 %v306, %v304
        %v317 = vpack.c.b16 %v307, %v307
        %v318 = vpack.c.b16 %v308, %v308
        %v361 = vunpack.c.l.b16 %v250
        %v362 = vunpack.c.l.b16 %v251
        %v363 = vunpack.c.l.b16 %v252
        %v364 = vunpack.c.l.b16 %v253
        %v365 = vunpack.c.l.b16 %v254
        %v366 = vunpack.c.l.b16 %v255
        %v367 = vunpack.c.l.b16 %v256
        %v368 = vunpack.c.l.b16 %v257
        %v369 = vunpack.c.l.b16 %v258
        %v370 = vunpack.c.l.b16 %v259
        %v371 = vunpack.c.l.b16 %v260
        %v372 = vunpack.c.l.b16 %v261
        %v373 = vunpack.c.l.b16 %v262
        %v374 = vunpack.c.l.b16 %v263
        %v375 = vunpack.c.l.b16 %v264
        %v376 = vunpack.c.l.b16 %v265
        %v377 = vunpack.c.l.b16 %v266
        %v378 = vunpack.c.l.b16 %v267
        %v379 = vunpack.c.l.b16 %v268
        %v380 = vunpack.c.l.b16 %v269
        %v381 = vunpack.c.l.b16 %v270
        %v382 = vunpack.c.l.b16 %v271
        %v383 = vunpack.c.l.b16 %v272
        %v384 = vunpack.c.l.b16 %v273
        %v385 = vunpack.c.l.b16 %v274
        %v386 = vunpack.c.l.b16 %v275
        %v387 = vunpack.c.l.b16 %v276
        %v388 = vunpack.c.l.b16 %v277
        %v389 = vunpack.c.l.b16 %v278
        %v390 = vunpack.c.l.b16 %v279
        %v391 = vunpack.c.l.b16 %v280
        %v392 = vunpack.c.l.b16 %v281
        %v393 = vpack.c.b16 %v362, %v361
        %v394 = vpack.c.b16 %v364, %v363
        %v395 = vpack.c.b16 %v366, %v365
        %v396 = vpack.c.b16 %v368, %v367
        %v397 = vpack.c.b16 %v370, %v369
        %v398 = vpack.c.b16 %v372, %v371
        %v399 = vpack.c.b16 %v374, %v373
        %v400 = vpack.c.b16 %v376, %v375
        %v401 = vpack.c.b16 %v378, %v377
        %v402 = vpack.c.b16 %v380, %v379
        %v403 = vpack.c.b16 %v382, %v381
        %v404 = vpack.c.b16 %v384, %v383
        %v405 = vpack.c.b16 %v386, %v385
        %v406 = vpack.c.b16 %v388, %v387
        %v407 = vpack.c.b16 %v390, %v389
        %v408 = vpack.c.b16 %v392, %v391
        %425 = vmatpush.bf16.msra.mxu0 %v400
        %426 = vmatpush.bf16.msra.mxu0 %v399
        %427 = vmatpush.bf16.msra.mxu0 %v398
        %428 = vmatpush.bf16.msra.mxu0 %v397
        %429 = vmatpush.bf16.msra.mxu0 %v396
        %430 = vmatpush.bf16.msra.mxu0 %v395
        %431 = vmatpush.bf16.msra.mxu0 %v394
        %432 = vmatpush.bf16.msra.mxu0 %v393
        %433 = vmatmul.bf16.gmra.mxu0 %v309
        %v434 = vpop.f32.mrf.mxu0
        %v435 = vadd.f32 0.0, %v434
        %v436 = vpop.f32.mrf.mxu0
        %v437 = vadd.f32 0.0, %v436
        %438 = vmatmul.bf16.gmra.mxu0 %v311
        %v439 = vpop.f32.mrf.mxu0
        %v440 = vadd.f32 0.0, %v439
        %v441 = vpop.f32.mrf.mxu0
        %v442 = vadd.f32 0.0, %v441
        %443 = vmatmul.bf16.gmra.mxu0 %v313
        %v444 = vpop.f32.mrf.mxu0
        %v445 = vadd.f32 0.0, %v444
        %v446 = vpop.f32.mrf.mxu0
        %v447 = vadd.f32 0.0, %v446
        %448 = vmatmul.bf16.gmra.mxu0 %v315
        %v449 = vpop.f32.mrf.mxu0
        %v450 = vadd.f32 0.0, %v449
        %v451 = vpop.f32.mrf.mxu0
        %v452 = vadd.f32 0.0, %v451
        %453 = vmatmul.bf16.gmra.mxu0 %v317
        %v454 = vpop.f32.mrf.mxu0
        %v455 = vadd.f32 0.0, %v454
        %v456 = vpop.f32.mrf.mxu0
        %457 = vdwg.mxu0
        %458 = vmatpush.bf16.msra.mxu0 %v408
        %459 = vmatpush.bf16.msra.mxu0 %v407
        %460 = vmatpush.bf16.msra.mxu0 %v406
        %461 = vmatpush.bf16.msra.mxu0 %v405
        %462 = vmatpush.bf16.msra.mxu0 %v404
        %463 = vmatpush.bf16.msra.mxu0 %v403
        %464 = vmatpush.bf16.msra.mxu0 %v402
        %465 = vmatpush.bf16.msra.mxu0 %v401
        %466 = vmatmul.bf16.gmra.mxu0 %v310
        %v467 = vpop.f32.mrf.mxu0
        %v468 = vadd.f32 %v435, %v467
        %v469 = vpop.f32.mrf.mxu0
        %v470 = vadd.f32 %v437, %v469
        %471 = vmatmul.bf16.gmra.mxu0 %v312
        %v472 = vpop.f32.mrf.mxu0
        %v473 = vadd.f32 %v440, %v472
        %v474 = vpop.f32.mrf.mxu0
        %v475 = vadd.f32 %v442, %v474
        %476 = vmatmul.bf16.gmra.mxu0 %v314
        %v477 = vpop.f32.mrf.mxu0
        %v478 = vadd.f32 %v445, %v477
        %v479 = vpop.f32.mrf.mxu0
        %v480 = vadd.f32 %v447, %v479
        %481 = vmatmul.bf16.gmra.mxu0 %v316
        %v482 = vpop.f32.mrf.mxu0
        %v483 = vadd.f32 %v450, %v482
        %v484 = vpop.f32.mrf.mxu0
        %v485 = vadd.f32 %v452, %v484
        %486 = vmatmul.bf16.gmra.mxu0 %v318
        %v487 = vpop.f32.mrf.mxu0
        %v488 = vadd.f32 %v455, %v487
        %v489 = vpop.f32.mrf.mxu0
        %490 = vdwg.mxu0
        %v491 = vadd.f32 %v232, %v468
        %v492 = vadd.f32 %v233, %v470
        %v493 = vadd.f32 %v234, %v473
        %v494 = vadd.f32 %v235, %v475
        %v495 = vadd.f32 %v236, %v478
        %v496 = vadd.f32 %v237, %v480
        %v497 = vadd.f32 %v238, %v483
        %v498 = vadd.f32 %v239, %v485
        %v499 = vadd.f32 %v240, %v488
        %500 = vst [vmem:[%s216] sm:$0xff] %v491
        %501 = vst [vmem:[%s216 + $0x8] sm:$0xff] %v492
        %502 = vst [vmem:[%s216 + $0x10] sm:$0xff] %v493
        %503 = vst [vmem:[%s216 + $0x18] sm:$0xff] %v494
        %504 = vst [vmem:[%s216 + $0x20] sm:$0xff] %v495
        %505 = vst [vmem:[%s216 + $0x28] sm:$0xff] %v496
        %506 = vst [vmem:[%s216 + $0x30] sm:$0xff] %v497
        %507 = vst [vmem:[%s216 + $0x38] sm:$0xff] %v498
        %508 = vst [vmem:[%s216 + $0x40] sm:$0xff] %v499
        %s509 = sand.u32 %s105, 1
        %s510 = scalar_lea.sflag [#allocation4], %s509
        %s511 = sand.u32 %s105, 1
        %s512 = smul.addr %s511, 72
        %s513 = scalar_lea.vmem [#allocation7], %s512
        // Predicated region
        $region41: #{tpu_custom_call.1} parent=27 // pred_check
          %p514 = pneg %p115
        $region42: #{tpu_custom_call.1} parent=27 // pred_check_branch
          %516 = sbr.rel (%p514) target = $region44
        $region43: #{tpu_custom_call.1} parent=27 // pred_region
          %518 = vsyncadd %s510, 0
          %s519 = smul.addr %s25, 9
          %s520 = sadd.s32 %s26, %s519
          %s521 = smul.addr %s520, 8
          %s522 = scalar_lea.hbm %s2, %s521
          %s523 = sshll.u32 %s513, 4
          %s524 = int_to_ptr.vmem [resolvable:$true] %s523
          %s525 = sshll.u32 %s522, 4
          %s526 = int_to_ptr.hbm [resolvable:$true] %s525
          %531 = dma.vmem_to_hbm [thread:$0]  %s524, 1152, %s526, %s510, 128, 128, 8
        $region44: #{tpu_custom_call.1} parent=27 // pred_fallthru
          _
      $region28: #{tpu_custom_call.1} parent=5 // pred_fallthru
        _
      %p532 = scmp.le.s32.totalorder 2, %s15
      // Predicated region
      $region45: #{tpu_custom_call.1} parent=5 // pred_check
        %p533 = pneg %p532
      $region46: #{tpu_custom_call.1} parent=5 // pred_check_branch
        %535 = sbr.rel (%p533) target = $region48
      $region47: #{tpu_custom_call.1} parent=5 // pred_region
        %s536 = ssub.s32 %s15, 2
        // Predicated region
        $region49: #{tpu_custom_call.1} parent=47 // pred_check
          %p537 = pneg %p121
        $region50: #{tpu_custom_call.1} parent=47 // pred_check_branch
          %539 = sbr.rel (%p537) target = $region52
        $region51: #{tpu_custom_call.1} parent=47 // pred_region
          %s540 = sand.u32 %s106, 1
          %s541 = scalar_lea.sflag [#allocation4], %s540
          %s542 = sand.u32 %s106, 1
          %s543 = smul.addr %s542, 72
          %s544 = scalar_lea.vmem [#allocation7], %s543
          %546 = dma.done %s541, 1152
        $region52: #{tpu_custom_call.1} parent=47 // pred_fallthru
          _
      $region48: #{tpu_custom_call.1} parent=5 // pred_fallthru
        _
    $region6: #{tpu_custom_call.1} parent=1 // loop_footer
      %s19 = sadd.s32 1, %s15
    $region7: #{tpu_custom_call.1} parent=1 // loop_footer_branch
      %14 = sbr.rel target = $region3
    $region8: #{tpu_custom_call.1} parent=1 // loop_exit
      _
    %547 = vsyncpa [#allocation3], 1
    %s548 = scalar_lea.sflag [#allocation3], 1
    %549 = vsyncpa %s548, 1
    %550 = vsyncpa [#allocation6], 1
    %551 = vsyncpa [#allocation4], 1
    %s552 = scalar_lea.sflag [#allocation4], 1
    %553 = vsyncpa %s552, 1

</llo_original>
